<compile_context>
chip_gen: v6e
topology: v6e:2x2x1
jax: 0.10.0
libtpu: 0.0.40
codegen_flags: <defaults>
</compile_context>

<pallas_src>
import jax
import jax.numpy as jnp
from jax.experimental import pallas as pl
from jax.experimental.pallas import tpu as pltpu


_LANE = 128
_SUBLANE = 8
_BASE = _LANE * _SUBLANE                 # 1024: minimum aligned element count
_COLS = 1024                             # lane-dense slab width (multiple of 128)
_ROW_ALIGN = 32                          # covers f32 (8), bf16 (16), int8 (32) tiling
_TARGET_BLOCK_BYTES = 2 * 1024 * 1024    # ~2 MiB tiles (near HBM-roofline plateau)


def _mish_kernel(x_ref, o_ref):
    x = x_ref[...]
    xf = x.astype(jnp.float32)           # widen in-vreg only; HBM stays in x.dtype

    # Single transcendental per element: t = exp(-|x|) in (0, 1].
    t = jnp.exp(-jnp.abs(xf))            # EUP

    # tanh(softplus(x)) = ((1+e^x)^2 - 1) / ((1+e^x)^2 + 1), rewritten with
    # t = exp(-|x|) so it never overflows:
    #   x >= 0: (2t + 1)     / (2t^2 + 2t + 1)
    #   x <  0: (t^2 + 2t)   / (t^2 + 2t + 2)
    two_t = t + t                        # 2t
    tt = t * t                           # t^2
    c = tt + two_t                       # t^2 + 2t   (shared)
    pos = xf >= 0.0
    num = jnp.where(pos, two_t + 1.0, c)
    den = jnp.where(pos, c + tt + 1.0, c + 2.0)

    # den is in (1, 5] -> approx reciprocal on the EUP is safe; one Newton step
    # on the VPU restores full f32 accuracy.
    inv = pl.reciprocal(den, approx=True)    # EUP
    inv = inv * (2.0 - den * inv)            # Newton step (VPU)

    o_ref[...] = (xf * num * inv).astype(o_ref.dtype)


def mish(x: jax.Array) -> jax.Array:
    """Elementwise Mish via Pallas. Accepts any shape (e.g. NCHW)."""
    orig_shape = x.shape
    total = x.size
    if total == 0:
        return x

    x_flat = jnp.reshape(x, (-1,))

    # Fast path: most conv activations are already a multiple of 8*128 —
    # no pad, no trailing slice, a single HBM read + write.
    padded_total = pl.cdiv(total, _BASE) * _BASE
    ragged = padded_total != total
    if ragged:
        # TODO(synk): for very large ragged inputs, mask the tail inside the
        # kernel instead of paying this extra HBM pad pass.
        x_flat = jnp.pad(x_flat, (0, padded_total - total))

    rows = padded_total // _COLS
    x2d = jnp.reshape(x_flat, (rows, _COLS))

    # ~2 MiB blocks (in the *input* dtype), rounded to an aligned row multiple.
    bytes_per_row = _COLS * x.dtype.itemsize
    target_rows = max(
        _ROW_ALIGN,
        (_TARGET_BLOCK_BYTES // bytes_per_row) // _ROW_ALIGN * _ROW_ALIGN,
    )
    if rows <= target_rows:
        block_rows = rows                 # single block == full array dims
        grid = (1,)
    else:
        block_rows = target_rows          # aligned; cdiv grid masks the tail
        grid = (pl.cdiv(rows, block_rows),)

    out2d = pl.pallas_call(
        _mish_kernel,
        out_shape=jax.ShapeDtypeStruct((rows, _COLS), x.dtype),
        grid_spec=pltpu.PrefetchScalarGridSpec(
            num_scalar_prefetch=0,
            grid=grid,
            in_specs=[pl.BlockSpec((block_rows, _COLS), lambda i: (i, 0))],
            out_specs=pl.BlockSpec((block_rows, _COLS), lambda i: (i, 0)),
        ),
        compiler_params=pltpu.CompilerParams(
            dimension_semantics=("parallel",)),
    )(x2d)

    out_flat = jnp.reshape(out2d, (-1,))
    if ragged:
        out_flat = out_flat[:total]
    return jnp.reshape(out_flat, orig_shape)


if __name__ == "__main__":
    key = jax.random.PRNGKey(0)
    # NCHW, matching the PyTorch module usage: batch=2, channels=4, 16x16 spatial.
    x = jax.random.normal(key, (2, 4, 16, 16), dtype=jnp.float32)

    y = mish(x)
    jax.block_until_ready(y)

    ref = x * jnp.tanh(jax.nn.softplus(x))
    assert y.shape == x.shape and y.dtype == x.dtype
    assert float(jnp.max(jnp.abs(y - ref))) < 1e-4

    # Wide-range numerical-stability check (|x| up to 100) for the algebraic
    # tanh(softplus) rewrite.
    xw = jnp.linspace(-100.0, 100.0, 8 * 1024, dtype=jnp.float32).reshape(8, 1024)
    yw = mish(xw)
    jax.block_until_ready(yw)
    refw = xw * jnp.tanh(jax.nn.softplus(xw))
    assert bool(jnp.isfinite(yw).all())
    assert float(jnp.max(jnp.abs(yw - refw) / (jnp.abs(refw) + 1.0))) < 1e-4

    # Ragged-size path (element count not a multiple of 8*128).
    xr = jax.random.normal(jax.random.PRNGKey(1), (3, 5, 7), dtype=jnp.float32)
    yr = mish(xr)
    jax.block_until_ready(yr)
    refr = xr * jnp.tanh(jax.nn.softplus(xr))
    assert yr.shape == xr.shape
    assert float(jnp.max(jnp.abs(yr - refr))) < 1e-4

    # Multi-block path (forces a grid > 1 with partial trailing block).
    xb = jax.random.normal(jax.random.PRNGKey(2), (600, 1024), dtype=jnp.float32)
    yb = mish(xb)
    jax.block_until_ready(yb)
    refb = xb * jnp.tanh(jax.nn.softplus(xb))
    assert float(jnp.max(jnp.abs(yb - refb))) < 1e-4

    print("KERNEL_OK")
</pallas_src>

<mosaic_0001>
module attributes {stable_mosaic.version = 11 : i64} {
  func.func @_mish_kernel(%arg0: i32, %arg1: memref<2x1024xf32, #tpu.memory_space<vmem>>, %arg2: memref<2x1024xf32, #tpu.memory_space<vmem>>) attributes {dimension_semantics = [#tpu.dimension_semantics<parallel>], iteration_bounds = array<i64: 1>, scalar_prefetch = 0 : i64, scratch_operands = 0 : i64, tpu.core_type = #tpu.core_type<tc>, window_params = [{transform_indices = @transform_0, window_bounds = array<i64: 2, 1024>}, {transform_indices = @transform_1, window_bounds = array<i64: 2, 1024>}]} {
    %c0 = arith.constant 0 : index
    %c0_0 = arith.constant 0 : index
    %0 = vector.load %arg1[%c0, %c0_0] : memref<2x1024xf32, #tpu.memory_space<vmem>>, vector<2x1024xf32>
    %1 = math.absf %0 : vector<2x1024xf32>
    %cst = arith.constant 0.000000e+00 : f32
    %2 = vector.broadcast %cst : f32 to vector<2x1024xf32>
    %3 = arith.subf %2, %1 : vector<2x1024xf32>
    %4 = math.exp %3 : vector<2x1024xf32>
    %5 = arith.addf %4, %4 : vector<2x1024xf32>
    %6 = arith.mulf %4, %4 : vector<2x1024xf32>
    %7 = arith.addf %6, %5 : vector<2x1024xf32>
    %cst_1 = arith.constant 0.000000e+00 : f32
    %8 = vector.broadcast %cst_1 : f32 to vector<2x1024xf32>
    %9 = arith.cmpf oge, %0, %8 : vector<2x1024xf32>
    %cst_2 = arith.constant 1.000000e+00 : f32
    %10 = vector.broadcast %cst_2 : f32 to vector<2x1024xf32>
    %11 = arith.addf %5, %10 : vector<2x1024xf32>
    %12 = arith.select %9, %11, %7 : vector<2x1024xi1>, vector<2x1024xf32>
    %13 = arith.addf %7, %6 : vector<2x1024xf32>
    %cst_3 = arith.constant 1.000000e+00 : f32
    %14 = vector.broadcast %cst_3 : f32 to vector<2x1024xf32>
    %15 = arith.addf %13, %14 : vector<2x1024xf32>
    %cst_4 = arith.constant 2.000000e+00 : f32
    %16 = vector.broadcast %cst_4 : f32 to vector<2x1024xf32>
    %17 = arith.addf %7, %16 : vector<2x1024xf32>
    %18 = arith.select %9, %15, %17 : vector<2x1024xi1>, vector<2x1024xf32>
    %19 = tpu.reciprocal %18 {approx = true} : vector<2x1024xf32> -> vector<2x1024xf32>
    %20 = arith.mulf %18, %19 : vector<2x1024xf32>
    %cst_5 = arith.constant 2.000000e+00 : f32
    %21 = vector.broadcast %cst_5 : f32 to vector<2x1024xf32>
    %22 = arith.subf %21, %20 : vector<2x1024xf32>
    %23 = arith.mulf %19, %22 : vector<2x1024xf32>
    %24 = arith.mulf %0, %12 : vector<2x1024xf32>
    %25 = arith.mulf %24, %23 : vector<2x1024xf32>
    %c0_6 = arith.constant 0 : index
    %c0_7 = arith.constant 0 : index
    %26 = vector.load %arg2[%c0_6, %c0_7] : memref<2x1024xf32, #tpu.memory_space<vmem>>, vector<2x1024xf32>
    tpu.vector_store %arg2[%c0_6, %c0_7], %25 {strides = array<i32>} : memref<2x1024xf32, #tpu.memory_space<vmem>>, vector<2x1024xf32>,
    return
  }
  func.func @transform_0(%arg0: i32) -> (i32, i32) {
    %c0_i32 = arith.constant 0 : i32
    %c0_i32_0 = arith.constant 0 : i32
    return %arg0, %c0_i32 : i32, i32
  }
  func.func @transform_1(%arg0: i32) -> (i32, i32) {
    %c0_i32 = arith.constant 0 : i32
    %c0_i32_0 = arith.constant 0 : i32
    return %arg0, %c0_i32 : i32, i32
  }
}

</mosaic_0001>

<llo_original>
// kernel: tpu_custom_call.1
$region0: #{tpu_custom_call.1}
  #allocation0 [shape = 'u32[]', space=smem, size = 0x4, offset = 0x4, fixed_abs, tag = 'smem constant byte address 0x4 - core index']
  #allocation1 [shape = 'u32[144,128]{1,0:T(1,128)}', space=vmem, size = 0x12000, scoped, tag = 'internal scratch']
  %s0 = inlined_call_operand.hbm [shape: f32[2,1024], index: 0, kind: input, shape index: {}]
  %s1 = inlined_call_operand.hbm [shape: f32[2,1024], index: 1, kind: output, shape index: {}]
  %s2 = sld [smem:[#allocation0]]
  $region18: #{tpu_custom_call.1} parent=0
    _
  %s4 = ssub.s32 1, %s2
  %s5 = scalar_select 0, %s4, %s2
  $region1: #{tpu_custom_call.1} parent=0
    #allocation2 [shape = 'u8[8192]{0}', space=vmem, size = 0x2000, scoped, tag = 'input window, operand 0, single buffered']
    #allocation3 [shape = 's32[1]{0}', space=sflag, size = 0x4, scoped, tag = 'scoped memory for tpu_custom_call.1']
    #allocation4 [shape = 's32[1]{0}', space=sflag, size = 0x4, scoped, tag = 'scoped memory for tpu_custom_call.1']
    #allocation5 [shape = 'u8[8192]{0}', space=vmem, size = 0x2000, scoped, tag = 'output window, operand 0, single buffered']
    %6 = vsyncpa [#allocation3], 0
    %7 = vsyncpa [#allocation4], 0
    // Predicated region
    $region2: #{tpu_custom_call.1} parent=1 // pred_check
      _
    $region3: #{tpu_custom_call.1} parent=1 // pred_check_branch
      %9 = sbr.rel (0) target = $region5
    $region4: #{tpu_custom_call.1} parent=1 // pred_region
      %s11 = ssub.s32 256, 256
      %12 = vsyncadd [#allocation3], %s11
      %s14 = sshll.u32 [#allocation2], 4
      %s15 = int_to_ptr.vmem [resolvable:$true] %s14
      %17 = dma.hbm_to_vmem [thread:$0]  %s0, 256, %s15, [#allocation3]
    $region5: #{tpu_custom_call.1} parent=1 // pred_fallthru
      _
    // Predicated region
    $region6: #{tpu_custom_call.1} parent=1 // pred_check
      _
    $region7: #{tpu_custom_call.1} parent=1 // pred_check_branch
      %19 = sbr.rel (0) target = $region9
    $region8: #{tpu_custom_call.1} parent=1 // pred_region
      %20 = dma.done [#allocation3], 256
    $region9: #{tpu_custom_call.1} parent=1 // pred_fallthru
      _
    %v21 = vld [vmem:[#allocation2] sm:$0xff]
    %v22 = vld [vmem:[#allocation2 + $0x8] sm:$0xff]
    %v23 = vand.u32 2147483647, %v21
    %v24 = vand.u32 2147483647, %v22
    %v25 = vsub.f32 0.0, %v23
    %v26 = vsub.f32 0.0, %v24
    %v27 = vmul.f32 %v25, 1.442695
    %v28 = vpow.pop %v27
    %v29 = vmul.f32 %v26, 1.442695
    %v30 = vpow.pop %v29
    %v31 = vadd.f32 %v28, %v28
    %v32 = vadd.f32 %v30, %v30
    %v33 = vmul.f32 %v28, %v28
    %v34 = vmul.f32 %v30, %v30
    %v35 = vadd.f32 %v33, %v31
    %v36 = vadd.f32 %v34, %v32
    %vm37 = vcmp.ge.f32.partialorder %v21, 0.0
    %vm38 = vcmp.ge.f32.partialorder %v22, 0.0
    %v39 = vadd.f32 %v31, 1.0
    %v40 = vadd.f32 %v32, 1.0
    %v41 = vsel %vm37, %v39, %v35
    %v42 = vsel %vm38, %v40, %v36
    %v43 = vadd.f32 %v35, %v33
    %v44 = vadd.f32 %v36, %v34
    %v45 = vadd.f32 %v43, 1.0
    %v46 = vadd.f32 %v44, 1.0
    %v47 = vadd.f32 %v35, 2.0
    %v48 = vadd.f32 %v36, 2.0
    %v49 = vsel %vm37, %v45, %v47
    %v50 = vsel %vm38, %v46, %v48
    %v51 = vrcp.pop %v49
    %v52 = vrcp.pop %v50
    %v53 = vmul.f32 %v49, %v51
    %v54 = vmul.f32 %v50, %v52
    %v55 = vsub.f32 2.0, %v53
    %v56 = vsub.f32 2.0, %v54
    %v57 = vmul.f32 %v51, %v55
    %v58 = vmul.f32 %v52, %v56
    %v59 = vmul.f32 %v21, %v41
    %v60 = vmul.f32 %v22, %v42
    %v61 = vmul.f32 %v59, %v57
    %v62 = vmul.f32 %v60, %v58
    %63 = vst [vmem:[#allocation5] sm:$0xff] %v61
    %64 = vst [vmem:[#allocation5 + $0x8] sm:$0xff] %v62
    // Predicated region
    $region10: #{tpu_custom_call.1} parent=1 // pred_check
      _
    $region11: #{tpu_custom_call.1} parent=1 // pred_check_branch
      %66 = sbr.rel (0) target = $region13
    $region12: #{tpu_custom_call.1} parent=1 // pred_region
      %s68 = ssub.s32 256, 256
      %69 = vsyncadd [#allocation4], %s68
      %s71 = sshll.u32 [#allocation5], 4
      %s72 = int_to_ptr.vmem [resolvable:$true] %s71
      %74 = dma.vmem_to_hbm [thread:$0]  %s72, 256, %s1, [#allocation4]
    $region13: #{tpu_custom_call.1} parent=1 // pred_fallthru
      _
    // Predicated region
    $region14: #{tpu_custom_call.1} parent=1 // pred_check
      _
    $region15: #{tpu_custom_call.1} parent=1 // pred_check_branch
      %76 = sbr.rel (0) target = $region17
    $region16: #{tpu_custom_call.1} parent=1 // pred_region
      %77 = dma.done [#allocation4], 256
    $region17: #{tpu_custom_call.1} parent=1 // pred_fallthru
      _
    %78 = vsyncpa [#allocation3], 1
    %79 = vsyncpa [#allocation4], 1

</llo_original>
